<compile_context>
chip_gen: v5e
topology: v5e:2x2
jax: 0.10.0
libtpu: 0.0.40
codegen_flags: <defaults>
</compile_context>

<pallas_src>
import functools

import jax
import jax.numpy as jnp
from jax import lax
from jax.experimental import pallas as pl
from jax.experimental.pallas import tpu as pltpu

LN_EPS = 1e-5


def _lmhead_kernel(x_ref, gamma_ref, beta_ref, w_ref, maxout_ref, tok_ref,
                   xn_scratch, colidx_scratch, maxval_scratch, argidx_scratch,
                   *, tv):
    v = pl.program_id(2)

    # ---- phase 0: LayerNorm of the resident seq tile (once per vocab scan) ----
    @pl.when(v == 0)
    def _():
        x = x_ref[...].astype(jnp.float32)                         # (ts, H)
        mean = jnp.mean(x, axis=-1, keepdims=True)
        xc = x - mean
        var = jnp.mean(xc * xc, axis=-1, keepdims=True)
        inv = lax.rsqrt(var + LN_EPS)
        xn = xc * inv * gamma_ref[...].astype(jnp.float32) \
             + beta_ref[...].astype(jnp.float32)
        # Store the MXU LHS once, already narrowed (bf16) — no per-step cast.
        xn_scratch[...] = xn.astype(xn_scratch.dtype)
        # Hoisted column-index iota (re-used every vocab step).
        colidx_scratch[...] = lax.broadcasted_iota(
            jnp.int32, colidx_scratch.shape, 1)
        maxval_scratch[...] = jnp.full_like(maxval_scratch, -jnp.inf)
        argidx_scratch[...] = jnp.zeros_like(argidx_scratch)

    # ---- matmul against this vocab tile ----
    # weight tile is the native PyTorch layout (tv, H): contiguous DMA, MXU
    # contracts over H (q @ k.T pattern), f32 accumulation.
    s = lax.dot_general(xn_scratch[...], w_ref[...],
                        dimension_numbers=(((1,), (1,)), ((), ())),
                        preferred_element_type=jnp.float32)         # (ts, tv)

    # ---- running argmax over the vocab axis ----
    tile_max = jnp.max(s, axis=-1, keepdims=True)                   # (ts, 1)
    big = jnp.int32(2 ** 30)
    # First index among equal maxima within the tile (torch.topk / argmax
    # tie-breaking); colidx_scratch is (1, tv) and broadcasts over sublanes.
    base = pl.program_id(0) * (pl.num_programs(2) * tv) + v * tv    # global offset
    tile_arg = jnp.min(jnp.where(s == tile_max, colidx_scratch[...], big),
                       axis=-1, keepdims=True) + base               # (ts, 1)

    better = tile_max > maxval_scratch[...]   # strict '>' keeps earlier tile
    argidx_scratch[...] = jnp.where(better, tile_arg, argidx_scratch[...])
    maxval_scratch[...] = jnp.where(better, tile_max, maxval_scratch[...])

    # ---- finalize: write this split's partial (max, argmax) ----
    @pl.when(v == pl.num_programs(2) - 1)
    def _():
        maxout_ref[0] = maxval_scratch[...]
        tok_ref[0] = argidx_scratch[...]


def _round_up(x, m):
    return ((x + m - 1) // m) * m


def _pick_vmem_limit():
    """Scoped-VMEM budget sized to the chip (64 MiB v7x, 128 MiB v5e/v6e)."""
    cap = None
    try:
        info = pltpu.get_tpu_info()
        cap = int(getattr(info, "vmem_capacity_bytes", 0)) or None
    except Exception:
        cap = None
    if cap is None:
        try:
            kind = jax.devices()[0].device_kind.lower()
            is_v7 = ("v7" in kind) or ("tpu7" in kind) or ("7x" in kind)
            cap = (64 if is_v7 else 128) * 1024 * 1024
        except Exception:
            cap = 64 * 1024 * 1024      # unknown chip: conservative
    return max(32 * 1024 * 1024, min(cap - 16 * 1024 * 1024, 100 * 1024 * 1024))


def _num_tensorcores():
    """Best-effort TensorCore count (2 on v7x, 1 on v5e/v6e)."""
    try:
        info = pltpu.get_tpu_info()
        for attr in ("num_cores", "num_tensorcores", "core_count"):
            n = getattr(info, attr, None)
            if n:
                return int(n)
    except Exception:
        pass
    try:
        kind = jax.devices()[0].device_kind.lower()
        if ("v7" in kind) or ("tpu7" in kind) or ("7x" in kind):
            return 2
    except Exception:
        pass
    return 1


def _choose_ts(M, H, x_itemsize, budget):
    """Seq-tile rows.  Decode: whole (padded) M -> weight read exactly once."""
    if M <= 256:
        return _round_up(M, 8)
    # Prefill: largest ts whose activation-side working set (assuming a
    # 1024-wide vocab tile) stays well under the budget; the weight re-streams
    # ceil(M/ts) times, so bigger ts directly cuts HBM traffic.
    for ts in (1024, 512, 256, 128):
        need = (2 * ts * H * x_itemsize      # double-buffered activation tile
                + ts * H * 2                 # bf16 xn scratch
                + 2 * ts * 1024 * 4          # logits / where temporaries
                + 4 * ts * 128 * 4)          # accumulators + padded outputs
        if need <= 0.4 * budget:
            return ts
    return 128


def _divisor_tiles(n, cap=16384):
    """Multiples of 8 that divide n, descending, capped (vocab-tile candidates)."""
    out = []
    t = min(cap, n)
    t -= t % 8
    while t >= 8:
        if n % t == 0:
            out.append(t)
        t -= 8
    return out or [n]


def _choose_tv(V_split, H, ts, x_itemsize, w_itemsize, budget):
    """Largest vocab tile whose full working set fits the scoped-VMEM budget."""
    cands = _divisor_tiles(V_split)
    for tv in cands:
        need = (2 * tv * H * w_itemsize      # double-buffered weight tile (tv, H)
                + 2 * ts * H * x_itemsize    # double-buffered activation tile
                + ts * H * 2                 # bf16 xn scratch
                + 2 * ts * tv * 4            # f32 logits + int32 where() temps
                + 8 * tv * 4                 # iota row (sublane-padded)
                + 4 * ts * 128 * 4)          # accumulators + lane-padded outputs
        if need <= budget:
            return tv
    return cands[-1]


def lm_head(hidden_states, gamma, beta, w_vh, *, ts=None, tv=None,
            mxu_dtype=jnp.bfloat16):
    """hidden_states: [B, S, H]; gamma/beta: [H]; w_vh: [V, H] (PyTorch
    nn.Linear layout, ideally already bf16) -> [B, S, 1] int32 token ids."""
    B, S, H = hidden_states.shape
    V = w_vh.shape[0]
    assert w_vh.shape == (V, H), w_vh.shape

    # The weight should arrive pre-cast (init-time cache); casting here would
    # add a full extra HBM pass over the largest tensor every call.
    if w_vh.dtype != mxu_dtype:
        w_vh = w_vh.astype(mxu_dtype)   # fallback only — avoid in production

    M = B * S
    x2d = hidden_states.reshape(M, H)

    vmem_limit = _pick_vmem_limit()
    budget = int(vmem_limit * 0.7)

    if ts is None:
        ts = _choose_ts(M, H, x2d.dtype.itemsize, budget)
    M_pad = _round_up(M, ts)
    if M_pad != M:
        x2d = jnp.pad(x2d, ((0, M_pad - M), (0, 0)))
    n_seq = M_pad // ts

    # Split the vocab reduction across TensorCores for decode shapes so both
    # v7x cores stream half of the weight; on 1-core chips nsplit stays 1.
    nsplit = 1
    if n_seq == 1 and _num_tensorcores() >= 2 and V % 2 == 0 and (V // 2) % 8 == 0:
        nsplit = 2
    V_split = V // nsplit

    if tv is None:
        tv = _choose_tv(V_split, H, ts, x2d.dtype.itemsize,
                        jnp.dtype(mxu_dtype).itemsize, budget)
    assert V_split % tv == 0, (V, nsplit, tv)

    grid = (nsplit, n_seq, V_split // tv)
    kernel = functools.partial(_lmhead_kernel, tv=tv)

    cost = pl.CostEstimate(
        flops=2 * M_pad * H * V,
        transcendentals=M_pad,
        bytes_accessed=(w_vh.size * w_vh.dtype.itemsize
                        + nsplit * M_pad * H * x2d.dtype.itemsize
                        + 2 * H * gamma.dtype.itemsize
                        + nsplit * M_pad * 8),
    )

    maxes, toks = pl.pallas_call(
        kernel,
        out_shape=(jax.ShapeDtypeStruct((nsplit, M_pad, 1), jnp.float32),
                   jax.ShapeDtypeStruct((nsplit, M_pad, 1), jnp.int32)),
        grid_spec=pltpu.PrefetchScalarGridSpec(
            num_scalar_prefetch=0,
            grid=grid,
            in_specs=[
                pl.BlockSpec((ts, H), lambda c, s, v: (s, 0)),   # hidden_states
                pl.BlockSpec((1, H), lambda c, s, v: (0, 0)),    # ln gamma
                pl.BlockSpec((1, H), lambda c, s, v: (0, 0)),    # ln beta
                pl.BlockSpec((tv, H), lambda c, s, v: (c * (pl.num_programs(2)) + v
                                                       if False else
                                                       c * pl.num_programs(2) + v, 0)),
            ],
            out_specs=[
                pl.BlockSpec((1, ts, 1), lambda c, s, v: (c, s, 0)),  # partial max
                pl.BlockSpec((1, ts, 1), lambda c, s, v: (c, s, 0)),  # partial argmax
            ],
            scratch_shapes=[
                pltpu.VMEM((ts, H), mxu_dtype),     # normalized x (MXU LHS)
                pltpu.VMEM((1, tv), jnp.int32),     # hoisted column iota
                pltpu.VMEM((ts, 1), jnp.float32),   # running max logit
                pltpu.VMEM((ts, 1), jnp.int32),     # running argmax
            ],
        ),
        compiler_params=pltpu.CompilerParams(
            dimension_semantics=("parallel", "parallel", "arbitrary"),
            vmem_limit_bytes=vmem_limit),
        cost_estimate=cost,
    )(x2d, gamma.reshape(1, H), beta.reshape(1, H), w_vh)

    # Merge the per-split partials (tiny (M,1) ops); strict '>' keeps the
    # earlier split (lower vocab ids) on ties -> first-index tie-breaking.
    best_val = maxes[0]
    best_idx = toks[0]
    for c in range(1, nsplit):
        better = maxes[c] > best_val
        best_idx = jnp.where(better, toks[c], best_idx)
        best_val = jnp.maximum(best_val, maxes[c])

    return best_idx[:M].reshape(B, S, 1)


if __name__ == "__main__":
    # Small synthetic shapes consistent with the module's forward:
    # batch=1, seq=8, hidden=32, vocab=256.
    B, S, H, V = 1, 8, 32, 256
    key = jax.random.PRNGKey(0)
    k1, k2, k3, k4 = jax.random.split(key, 4)

    hidden_states = jax.random.normal(k1, (B, S, H), dtype=jnp.float32)
    gamma = 1.0 + 0.1 * jax.random.normal(k2, (H,), dtype=jnp.float32)
    beta = 0.1 * jax.random.normal(k3, (H,), dtype=jnp.float32)
    # lm_head: nn.Linear(H, V, bias=False); native torch layout [V, H],
    # cast to bf16 once at "init" (outside the hot path).
    w_vh = (jax.random.normal(k4, (V, H), dtype=jnp.float32)
            / jnp.sqrt(H)).astype(jnp.bfloat16)

    tok = jax.block_until_ready(lm_head(hidden_states, gamma, beta, w_vh))
    assert tok.shape == (B, S, 1), tok.shape
    assert tok.dtype == jnp.int32

    # Reference mirroring the kernel numerics (f32 LayerNorm, bf16 MXU operands).
    x = hidden_states.astype(jnp.float32).reshape(B * S, H)
    mean = jnp.mean(x, axis=-1, keepdims=True)
    var = jnp.mean((x - mean) ** 2, axis=-1, keepdims=True)
    xn = (x - mean) * lax.rsqrt(var + LN_EPS) * gamma + beta
    logits = lax.dot_general(xn.astype(jnp.bfloat16), w_vh,
                             dimension_numbers=(((1,), (1,)), ((), ())),
                             preferred_element_type=jnp.float32)
    ref_tok = jnp.argmax(logits, axis=-1, keepdims=True).astype(jnp.int32)
    ref_tok = ref_tok.reshape(B, S, 1)

    exact = bool(jnp.array_equal(tok, ref_tok))
    # Tolerance-aware fallback: the kernel's chosen token must be (near-)argmax.
    chosen = jnp.take_along_axis(logits, tok.reshape(B * S, 1), axis=-1)
    near_max = bool(jnp.all(
        chosen >= jnp.max(logits, axis=-1, keepdims=True) - 1e-3))
    assert exact or near_max, (tok.ravel(), ref_tok.ravel())
    print("KERNEL_OK")
</pallas_src>

<mosaic_0001>
module attributes {stable_mosaic.version = 11 : i64} {
  func.func @_lmhead_kernel(%arg0: i32, %arg1: i32, %arg2: i32, %arg3: memref<8x32xf32, #tpu.memory_space<vmem>>, %arg4: memref<1x32xf32, #tpu.memory_space<vmem>>, %arg5: memref<1x32xf32, #tpu.memory_space<vmem>>, %arg6: memref<256x32xbf16, #tpu.memory_space<vmem>>, %arg7: memref<1x8x1xf32, #tpu.memory_space<vmem>>, %arg8: memref<1x8x1xi32, #tpu.memory_space<vmem>>, %arg9: memref<8x32xbf16, #tpu.memory_space<vmem>>, %arg10: memref<1x256xi32, #tpu.memory_space<vmem>>, %arg11: memref<8x1xf32, #tpu.memory_space<vmem>>, %arg12: memref<8x1xi32, #tpu.memory_space<vmem>>) attributes {dimension_semantics = [#tpu.dimension_semantics<parallel>, #tpu.dimension_semantics<parallel>, #tpu.dimension_semantics<arbitrary>], iteration_bounds = array<i64: 1, 1, 1>, scalar_prefetch = 0 : i64, scratch_operands = 4 : i64, tpu.core_type = #tpu.core_type<tc>, window_params = [{transform_indices = @transform_0, window_bounds = array<i64: 8, 32>}, {pipeline_mode = #tpu.pipeline_mode<synchronous>, transform_indices = @transform_1, window_bounds = array<i64: 1, 32>}, {pipeline_mode = #tpu.pipeline_mode<synchronous>, transform_indices = @transform_2, window_bounds = array<i64: 1, 32>}, {transform_indices = @transform_3, window_bounds = array<i64: 256, 32>}, {transform_indices = @transform_4, window_bounds = array<i64: 1, 8, 1>}, {transform_indices = @transform_5, window_bounds = array<i64: 1, 8, 1>}]} {
    %c0_i32 = arith.constant 0 : i32
    %0 = arith.cmpi eq, %arg2, %c0_i32 : i32
    %1 = arith.extui %0 : i1 to i32
    %c0_i32_0 = arith.constant 0 : i32
    %2 = arith.cmpi ne, %1, %c0_i32_0 : i32
    scf.if %2 {
      %c0_21 = arith.constant 0 : index
      %c0_22 = arith.constant 0 : index
      %33 = vector.load %arg3[%c0_21, %c0_22] : memref<8x32xf32, #tpu.memory_space<vmem>>, vector<8x32xf32>
      %cst_23 = arith.constant dense<0.000000e+00> : vector<8xf32>
      %34 = vector.multi_reduction <add>, %33, %cst_23 [1] : vector<8x32xf32> to vector<8xf32>
      %35 = vector.shape_cast %34 : vector<8xf32> to vector<8x1xf32>
      %cst_24 = arith.constant 3.200000e+01 : f32
      %36 = vector.broadcast %cst_24 : f32 to vector<8x1xf32>
      %37 = arith.divf %35, %36 : vector<8x1xf32>
      %38 = vector.broadcast %37 : vector<8x1xf32> to vector<8x32xf32>
      %39 = arith.subf %33, %38 : vector<8x32xf32>
      %40 = arith.mulf %39, %39 : vector<8x32xf32>
      %cst_25 = arith.constant dense<0.000000e+00> : vector<8xf32>
      %41 = vector.multi_reduction <add>, %40, %cst_25 [1] : vector<8x32xf32> to vector<8xf32>
      %42 = vector.shape_cast %41 : vector<8xf32> to vector<8x1xf32>
      %cst_26 = arith.constant 3.200000e+01 : f32
      %43 = vector.broadcast %cst_26 : f32 to vector<8x1xf32>
      %44 = arith.divf %42, %43 : vector<8x1xf32>
      %cst_27 = arith.constant 9.99999974E-6 : f32
      %45 = vector.broadcast %cst_27 : f32 to vector<8x1xf32>
      %46 = arith.addf %44, %45 : vector<8x1xf32>
      %47 = math.rsqrt %46 : vector<8x1xf32>
      %48 = vector.broadcast %47 : vector<8x1xf32> to vector<8x32xf32>
      %49 = arith.mulf %39, %48 : vector<8x32xf32>
      %c0_28 = arith.constant 0 : index
      %c0_29 = arith.constant 0 : index
      %50 = vector.load %arg4[%c0_28, %c0_29] : memref<1x32xf32, #tpu.memory_space<vmem>>, vector<1x32xf32>
      %51 = vector.broadcast %50 : vector<1x32xf32> to vector<8x32xf32>
      %52 = arith.mulf %49, %51 : vector<8x32xf32>
      %c0_30 = arith.constant 0 : index
      %c0_31 = arith.constant 0 : index
      %53 = vector.load %arg5[%c0_30, %c0_31] : memref<1x32xf32, #tpu.memory_space<vmem>>, vector<1x32xf32>
      %54 = vector.broadcast %53 : vector<1x32xf32> to vector<8x32xf32>
      %55 = arith.addf %52, %54 : vector<8x32xf32>
      %56 = arith.truncf %55 : vector<8x32xf32> to vector<8x32xbf16>
      %c0_32 = arith.constant 0 : index
      %c0_33 = arith.constant 0 : index
      %57 = vector.load %arg9[%c0_32, %c0_33] : memref<8x32xbf16, #tpu.memory_space<vmem>>, vector<8x32xbf16>
      tpu.vector_store %arg9[%c0_32, %c0_33], %56 {strides = array<i32>} : memref<8x32xbf16, #tpu.memory_space<vmem>>, vector<8x32xbf16>,
      %58 = tpu.iota {dimensions = array<i32: 1>} : vector<1x256xi32>
      %c0_34 = arith.constant 0 : index
      %c0_35 = arith.constant 0 : index
      %59 = vector.load %arg10[%c0_34, %c0_35] : memref<1x256xi32, #tpu.memory_space<vmem>>, vector<1x256xi32>
      tpu.vector_store %arg10[%c0_34, %c0_35], %58 {strides = array<i32>} : memref<1x256xi32, #tpu.memory_space<vmem>>, vector<1x256xi32>,
      %cst_36 = arith.constant 0xFF800000 : f32
      %60 = vector.broadcast %cst_36 : f32 to vector<8x1xf32>
      %c0_37 = arith.constant 0 : index
      %c0_38 = arith.constant 0 : index
      %61 = vector.load %arg11[%c0_37, %c0_38] : memref<8x1xf32, #tpu.memory_space<vmem>>, vector<8x1xf32>
      tpu.vector_store %arg11[%c0_37, %c0_38], %60 {strides = array<i32>} : memref<8x1xf32, #tpu.memory_space<vmem>>, vector<8x1xf32>,
      %c0_i32_39 = arith.constant 0 : i32
      %62 = vector.broadcast %c0_i32_39 : i32 to vector<8x1xi32>
      %c0_40 = arith.constant 0 : index
      %c0_41 = arith.constant 0 : index
      %63 = vector.load %arg12[%c0_40, %c0_41] : memref<8x1xi32, #tpu.memory_space<vmem>>, vector<8x1xi32>
      tpu.vector_store %arg12[%c0_40, %c0_41], %62 {strides = array<i32>} : memref<8x1xi32, #tpu.memory_space<vmem>>, vector<8x1xi32>,
    } else {
    }
    %c0 = arith.constant 0 : index
    %c0_1 = arith.constant 0 : index
    %3 = vector.load %arg9[%c0, %c0_1] : memref<8x32xbf16, #tpu.memory_space<vmem>>, vector<8x32xbf16>
    %c0_2 = arith.constant 0 : index
    %c0_3 = arith.constant 0 : index
    %4 = vector.load %arg6[%c0_2, %c0_3] : memref<256x32xbf16, #tpu.memory_space<vmem>>, vector<256x32xbf16>
    %cst = arith.constant dense<0.000000e+00> : vector<8x256xf32>
    %5 = tpu.matmul %3, %4, %cst {dimension_numbers = #tpu.dot_dimension_numbers<[1], [1], [0], [0], [0, 0, 1, 0], [], []>} : vector<8x32xbf16>, vector<256x32xbf16>, vector<8x256xf32> -> vector<8x256xf32>
    %cst_4 = arith.constant dense<0xFF800000> : vector<8xf32>
    %6 = vector.multi_reduction <maximumf>, %5, %cst_4 [1] : vector<8x256xf32> to vector<8xf32>
    %7 = vector.shape_cast %6 : vector<8xf32> to vector<8x1xf32>
    %c256_i32 = arith.constant 256 : i32
    %8 = arith.muli %arg0, %c256_i32 : i32
    %c256_i32_5 = arith.constant 256 : i32
    %9 = arith.muli %arg2, %c256_i32_5 : i32
    %10 = arith.addi %8, %9 : i32
    %11 = vector.broadcast %7 : vector<8x1xf32> to vector<8x256xf32>
    %12 = arith.cmpf oeq, %5, %11 : vector<8x256xf32>
    %c0_6 = arith.constant 0 : index
    %c0_7 = arith.constant 0 : index
    %13 = vector.load %arg10[%c0_6, %c0_7] : memref<1x256xi32, #tpu.memory_space<vmem>>, vector<1x256xi32>
    %c1073741824_i32 = arith.constant 1073741824 : i32
    %14 = vector.shape_cast %13 : vector<1x256xi32> to vector<1x256xi32>
    %15 = vector.broadcast %14 : vector<1x256xi32> to vector<8x256xi32>
    %16 = vector.broadcast %c1073741824_i32 : i32 to vector<8x256xi32>
    %17 = arith.select %12, %15, %16 : vector<8x256xi1>, vector<8x256xi32>
    %cst_8 = arith.constant dense<2147483647> : vector<8xi32>
    %18 = vector.multi_reduction <minsi>, %17, %cst_8 [1] : vector<8x256xi32> to vector<8xi32>
    %19 = vector.shape_cast %18 : vector<8xi32> to vector<8x1xi32>
    %20 = vector.broadcast %10 : i32 to vector<8x1xi32>
    %21 = arith.addi %19, %20 : vector<8x1xi32>
    %c0_9 = arith.constant 0 : index
    %c0_10 = arith.constant 0 : index
    %22 = vector.load %arg11[%c0_9, %c0_10] : memref<8x1xf32, #tpu.memory_space<vmem>>, vector<8x1xf32>
    %23 = arith.cmpf ogt, %7, %22 : vector<8x1xf32>
    %c0_11 = arith.constant 0 : index
    %c0_12 = arith.constant 0 : index
    %24 = vector.load %arg12[%c0_11, %c0_12] : memref<8x1xi32, #tpu.memory_space<vmem>>, vector<8x1xi32>
    %25 = arith.select %23, %21, %24 : vector<8x1xi1>, vector<8x1xi32>
    %c0_13 = arith.constant 0 : index
    %c0_14 = arith.constant 0 : index
    %26 = vector.load %arg12[%c0_13, %c0_14] : memref<8x1xi32, #tpu.memory_space<vmem>>, vector<8x1xi32>
    tpu.vector_store %arg12[%c0_13, %c0_14], %25 {strides = array<i32>} : memref<8x1xi32, #tpu.memory_space<vmem>>, vector<8x1xi32>,
    %c0_15 = arith.constant 0 : index
    %c0_16 = arith.constant 0 : index
    %27 = vector.load %arg11[%c0_15, %c0_16] : memref<8x1xf32, #tpu.memory_space<vmem>>, vector<8x1xf32>
    %28 = arith.select %23, %7, %27 : vector<8x1xi1>, vector<8x1xf32>
    %c0_17 = arith.constant 0 : index
    %c0_18 = arith.constant 0 : index
    %29 = vector.load %arg11[%c0_17, %c0_18] : memref<8x1xf32, #tpu.memory_space<vmem>>, vector<8x1xf32>
    tpu.vector_store %arg11[%c0_17, %c0_18], %28 {strides = array<i32>} : memref<8x1xf32, #tpu.memory_space<vmem>>, vector<8x1xf32>,
    %c0_i32_19 = arith.constant 0 : i32
    %30 = arith.cmpi eq, %arg2, %c0_i32_19 : i32
    %31 = arith.extui %30 : i1 to i32
    %c0_i32_20 = arith.constant 0 : i32
    %32 = arith.cmpi ne, %31, %c0_i32_20 : i32
    scf.if %32 {
      %c0_21 = arith.constant 0 : index
      %c0_22 = arith.constant 0 : index
      %33 = vector.load %arg11[%c0_21, %c0_22] : memref<8x1xf32, #tpu.memory_space<vmem>>, vector<8x1xf32>
      %c0_23 = arith.constant 0 : index
      %c0_24 = arith.constant 0 : index
      %c0_25 = arith.constant 0 : index
      %34 = vector.load %arg7[%c0_23, %c0_24, %c0_25] : memref<1x8x1xf32, #tpu.memory_space<vmem>>, vector<1x8x1xf32>
      %35 = vector.shape_cast %34 : vector<1x8x1xf32> to vector<8x1xf32>
      %36 = vector.shape_cast %33 : vector<8x1xf32> to vector<1x8x1xf32>
      tpu.vector_store %arg7[%c0_23, %c0_24, %c0_25], %36 {strides = array<i32>} : memref<1x8x1xf32, #tpu.memory_space<vmem>>, vector<1x8x1xf32>,
      %c0_26 = arith.constant 0 : index
      %c0_27 = arith.constant 0 : index
      %37 = vector.load %arg12[%c0_26, %c0_27] : memref<8x1xi32, #tpu.memory_space<vmem>>, vector<8x1xi32>
      %c0_28 = arith.constant 0 : index
      %c0_29 = arith.constant 0 : index
      %c0_30 = arith.constant 0 : index
      %38 = vector.load %arg8[%c0_28, %c0_29, %c0_30] : memref<1x8x1xi32, #tpu.memory_space<vmem>>, vector<1x8x1xi32>
      %39 = vector.shape_cast %38 : vector<1x8x1xi32> to vector<8x1xi32>
      %40 = vector.shape_cast %37 : vector<8x1xi32> to vector<1x8x1xi32>
      tpu.vector_store %arg8[%c0_28, %c0_29, %c0_30], %40 {strides = array<i32>} : memref<1x8x1xi32, #tpu.memory_space<vmem>>, vector<1x8x1xi32>,
    } else {
    }
    return
  }
  func.func @transform_0(%arg0: i32, %arg1: i32, %arg2: i32) -> (i32, i32) {
    %c0_i32 = arith.constant 0 : i32
    %c0_i32_0 = arith.constant 0 : i32
    return %arg1, %c0_i32 : i32, i32
  }
  func.func @transform_1(%arg0: i32, %arg1: i32, %arg2: i32) -> (i32, i32) {
    %c0_i32 = arith.constant 0 : i32
    %c0_i32_0 = arith.constant 0 : i32
    %c0_i32_1 = arith.constant 0 : i32
    return %c0_i32, %c0_i32_0 : i32, i32
  }
  func.func @transform_2(%arg0: i32, %arg1: i32, %arg2: i32) -> (i32, i32) {
    %c0_i32 = arith.constant 0 : i32
    %c0_i32_0 = arith.constant 0 : i32
    %c0_i32_1 = arith.constant 0 : i32
    return %c0_i32, %c0_i32_0 : i32, i32
  }
  func.func @transform_3(%arg0: i32, %arg1: i32, %arg2: i32) -> (i32, i32) {
    %c1_i32 = arith.constant 1 : i32
    %0 = arith.muli %arg0, %c1_i32 : i32
    %1 = arith.addi %0, %arg2 : i32
    %c0_i32 = arith.constant 0 : i32
    %c0_i32_0 = arith.constant 0 : i32
    return %1, %c0_i32 : i32, i32
  }
  func.func @transform_4(%arg0: i32, %arg1: i32, %arg2: i32) -> (i32, i32, i32) {
    %c0_i32 = arith.constant 0 : i32
    %c0_i32_0 = arith.constant 0 : i32
    return %arg0, %arg1, %c0_i32 : i32, i32, i32
  }
  func.func @transform_5(%arg0: i32, %arg1: i32, %arg2: i32) -> (i32, i32, i32) {
    %c0_i32 = arith.constant 0 : i32
    %c0_i32_0 = arith.constant 0 : i32
    return %arg0, %arg1, %c0_i32 : i32, i32, i32
  }
}

</mosaic_0001>

<llo_original>
// kernel: tpu_custom_call.1
$region0: #{tpu_custom_call.1}
  #allocation0 [shape = 'u32[]', space=smem, size = 0x4, offset = 0x4, fixed_abs, tag = 'smem constant byte address 0x4 - core index']
  #allocation1 [shape = 'u32[72,128]{1,0:T(1,128)}', space=vmem, size = 0x9000, scoped, tag = 'internal scratch']
  #allocation2 [shape = 'bf16[8,32]{1,0:T(8,128)(2,1)}', space=vmem, size = 0x800, scoped, tag = 'scratch operand']
  #allocation3 [shape = 's32[1,256]{1,0:T(1,128)}', space=vmem, size = 0x400, scoped, tag = 'scratch operand']
  #allocation4 [shape = 'f32[8,1]{1,0:T(8,128)}', space=vmem, size = 0x1000, scoped, tag = 'scratch operand']
  #allocation5 [shape = 's32[8,1]{1,0:T(8,128)}', space=vmem, size = 0x1000, scoped, tag = 'scratch operand']
  %s0 = inlined_call_operand.vmem [shape: f32[8,32], index: 0, kind: input, shape index: {}]
  %s1 = inlined_call_operand.vmem [shape: f32[1,32], index: 1, kind: input, shape index: {}]
  %s2 = inlined_call_operand.vmem [shape: f32[1,32], index: 2, kind: input, shape index: {}]
  %s3 = inlined_call_operand.vmem [shape: bf16[256,32], index: 3, kind: input, shape index: {}]
  %s4 = inlined_call_operand.vmem [shape: f32[1,8,1], index: 4, kind: output, shape index: {0}]
  %s5 = inlined_call_operand.vmem [shape: s32[1,8,1], index: 5, kind: output, shape index: {1}]
  %6 = xla_tuple %s4, %s5
  %s7 = sld [smem:[#allocation0]]
  $region42: #{tpu_custom_call.1} parent=0
    _
  %s9 = ssub.s32 1, %s7
  %s10 = scalar_select 0, %s9, %s7
  // Predicated region
  $region2: #{tpu_custom_call.1} parent=0 // pred_check
    _
  $region3: #{tpu_custom_call.1} parent=0 // pred_check_branch
    %12 = sbr.rel (0) target = $region5
  $region4: #{tpu_custom_call.1} parent=0 // pred_region
    _
  $region5: #{tpu_custom_call.1} parent=0 // pred_fallthru
    _
  // Predicated region
  $region6: #{tpu_custom_call.1} parent=0 // pred_check
    _
  $region7: #{tpu_custom_call.1} parent=0 // pred_check_branch
    %14 = sbr.rel (0) target = $region9
  $region8: #{tpu_custom_call.1} parent=0 // pred_region
    _
  $region9: #{tpu_custom_call.1} parent=0 // pred_fallthru
    _
  // Predicated region
  $region10: #{tpu_custom_call.1} parent=0 // pred_check
    _
  $region11: #{tpu_custom_call.1} parent=0 // pred_check_branch
    %16 = sbr.rel (0) target = $region13
  $region12: #{tpu_custom_call.1} parent=0 // pred_region
    _
  $region13: #{tpu_custom_call.1} parent=0 // pred_fallthru
    _
  // Predicated region
  $region14: #{tpu_custom_call.1} parent=0 // pred_check
    _
  $region15: #{tpu_custom_call.1} parent=0 // pred_check_branch
    %18 = sbr.rel (0) target = $region17
  $region16: #{tpu_custom_call.1} parent=0 // pred_region
    %s19 = sadd.s32 0, 0
    %s20 = smul.u32 32, %s19
    %p21 = scmp.lt.s32.totalorder %s20, 31
    %s22 = scalar_select %p21, %s20, 31
    %s23 = smul.addr %s22, 4
    %s24 = scalar_lea.vmem %s3, %s23
    %s25 = sadd.s32 0, 0
    %s26 = smul.u32 32, %s25
  $region17: #{tpu_custom_call.1} parent=0 // pred_fallthru
    _
  %s27 = sadd.s32 0, 0
  %s28 = smul.u32 32, %s27
  %p29 = scmp.lt.s32.totalorder %s28, 31
  %s30 = scalar_select %p29, %s28, 31
  %s31 = smul.addr %s30, 4
  %s32 = scalar_lea.vmem %s3, %s31
  %s33 = sadd.s32 0, 0
  %s34 = smul.u32 32, %s33
  %p35 = scmp.lt.s32.totalorder %s34, 31
  %s36 = scalar_select %p35, %s34, 31
  %s37 = smul.addr %s36, 4
  %s38 = scalar_lea.vmem %s3, %s37
  %s39 = sadd.s32 0, 0
  %s40 = smul.u32 32, %s39
  %p41 = scmp.eq.s32.totalorder 0, 0
  // Predicated region
  $region18: #{tpu_custom_call.1} parent=0 // pred_check
    %p42 = pneg %p41
  $region19: #{tpu_custom_call.1} parent=0 // pred_check_branch
    %44 = sbr.rel (%p42) target = $region21
  $region20: #{tpu_custom_call.1} parent=0 // pred_region
    %v45 = vld [vmem:[%s0] sm:$0xff]
    %vm46 = vcmask 261120
    %v47 = vsel %vm46, %v45, 0.0
    %48 = vadd.xlane.f32.xlu0 %v47
    %v49 = vpop.xlane.xlu0 %48
    %v50 = vrcp.pop 32.0
    %v51 = vmul.f32 32.0, %v50
    %v52 = vsub.f32 1.0, %v51
    %v53 = vmul.f32 %v50, %v52
    %v54 = vadd.f32 %v50, %v53
    %vm55 = vweird.f32 %v50
    %v56 = vsel %vm55, %v50, %v54
    %v57 = vmul.f32 %v49, %v56
    %v58 = vsub.f32 %v45, %v57
    %v59 = vmul.f32 %v58, %v58
    %v60 = vsel %vm46, %v59, 0.0
    %61 = vadd.xlane.f32.xlu0 %v60
    %v62 = vpop.xlane.xlu0 %61
    %v63 = vmul.f32 %v62, %v56
    %v64 = vadd.f32 %v63, 1e-05
    %v65 = vrsqrt.pop %v64
    %v66 = vmul.f32 %v65, %v64
    %v67 = vmul.f32 %v66, %v65
    %v68 = vmul.f32 0.5, %v67
    %v69 = vsub.f32 1.5, %v68
    %v70 = vmul.f32 %v65, %v69
    %vm71 = vweird.f32 %v64
    %vm72 = vweird.f32 %v65
    %vm73 = vmor %vm71, %vm72
    %v74 = vsel %vm73, %v65, %v70
    %v75 = vmul.f32 %v58, %v74
    %v76 = vld [vmem:[%s1] sm:$0x1]
    %v78 = vperm.slane %v76, 0
    %v80 = vmul.f32 %v75, %v78
    %v81 = vld [vmem:[%s2] sm:$0x1]
    %v83 = vperm.slane %v81, 0
    %v85 = vadd.f32 %v80, %v83
    %v86 = vpack.c.bf16 %v85, %v85
    %vm87 = vcmask 257024
    %88 = vst.msk [vmem:[#allocation2] sm:$0xf] %vm87, %v86
    %v89 = vlaneseq
    %v90 = vand.u32 %v89, 127
    %v91 = vadd.s32 %v90, 128
    %v92 = vrot.slane %v91, 7
    %vm93 = vcmask 1040384
    %v94 = vsel %vm93, %v90, %v92
    %v95 = vlaneseq
    %vm96 = vcmp.ge.s32.totalorder %v95, 0
    %vm97 = vcmp.lt.s32.totalorder %v95, 256
    %vm98 = vmand %vm96, %vm97
    %99 = vst.msk [vmem:[#allocation3] sm:$0x3] %vm98, %v94
    %vm100 = vcmask 7168
    %101 = vst.msk [vmem:[#allocation4] sm:$0xff] %vm100, -inf
    %102 = vst.msk [vmem:[#allocation5] sm:$0xff] %vm100, 0
  $region21: #{tpu_custom_call.1} parent=0 // pred_fallthru
    _
  %v103 = vld [vmem:[#allocation2] sm:$0xf]
  %v104 = vld [vmem:[%s38] sm:$0xf]
  %v105 = vld [vmem:[%s38 + $0x4] sm:$0xf]
  %v106 = vld [vmem:[%s38 + $0x8] sm:$0xf]
  %v107 = vld [vmem:[%s38 + $0xc] sm:$0xf]
  %v108 = vld [vmem:[%s38 + $0x10] sm:$0xf]
  %v109 = vld [vmem:[%s38 + $0x14] sm:$0xf]
  %v110 = vld [vmem:[%s38 + $0x18] sm:$0xf]
  %v111 = vld [vmem:[%s38 + $0x1c] sm:$0xf]
  %v112 = vld [vmem:[%s38 + $0x20] sm:$0xf]
  %v113 = vld [vmem:[%s38 + $0x24] sm:$0xf]
  %v114 = vld [vmem:[%s38 + $0x28] sm:$0xf]
  %v115 = vld [vmem:[%s38 + $0x2c] sm:$0xf]
  %v116 = vld [vmem:[%s38 + $0x30] sm:$0xf]
  %v117 = vld [vmem:[%s38 + $0x34] sm:$0xf]
  %v118 = vld [vmem:[%s38 + $0x38] sm:$0xf]
  %v119 = vld [vmem:[%s38 + $0x3c] sm:$0xf]
  %v120 = vld [vmem:[%s38 + $0x40] sm:$0xf]
  %v121 = vld [vmem:[%s38 + $0x44] sm:$0xf]
  %v122 = vld [vmem:[%s38 + $0x48] sm:$0xf]
  %v123 = vld [vmem:[%s38 + $0x4c] sm:$0xf]
  %v124 = vld [vmem:[%s38 + $0x50] sm:$0xf]
  %v125 = vld [vmem:[%s38 + $0x54] sm:$0xf]
  %v126 = vld [vmem:[%s38 + $0x58] sm:$0xf]
  %v127 = vld [vmem:[%s38 + $0x5c] sm:$0xf]
  %v128 = vld [vmem:[%s38 + $0x60] sm:$0xf]
  %v129 = vld [vmem:[%s38 + $0x64] sm:$0xf]
  %v130 = vld [vmem:[%s38 + $0x68] sm:$0xf]
  %v131 = vld [vmem:[%s38 + $0x6c] sm:$0xf]
  %v132 = vld [vmem:[%s38 + $0x70] sm:$0xf]
  %v133 = vld [vmem:[%s38 + $0x74] sm:$0xf]
  %v134 = vld [vmem:[%s38 + $0x78] sm:$0xf]
  %v135 = vld [vmem:[%s38 + $0x7c] sm:$0xf]
  %v168 = vunpack.c.l.b16 %v104
  %v169 = vunpack.c.l.b16 %v105
  %v170 = vunpack.c.l.b16 %v106
  %v171 = vunpack.c.l.b16 %v107
  %v172 = vunpack.c.l.b16 %v108
  %v173 = vunpack.c.l.b16 %v109
  %v174 = vunpack.c.l.b16 %v110
  %v175 = vunpack.c.l.b16 %v111
  %v176 = vunpack.c.l.b16 %v112
  %v177 = vunpack.c.l.b16 %v113
  %v178 = vunpack.c.l.b16 %v114
  %v179 = vunpack.c.l.b16 %v115
  %v180 = vunpack.c.l.b16 %v116
  %v181 = vunpack.c.l.b16 %v117
  %v182 = vunpack.c.l.b16 %v118
  %v183 = vunpack.c.l.b16 %v119
  %v184 = vunpack.c.l.b16 %v120
  %v185 = vunpack.c.l.b16 %v121
  %v186 = vunpack.c.l.b16 %v122
  %v187 = vunpack.c.l.b16 %v123
  %v188 = vunpack.c.l.b16 %v124
  %v189 = vunpack.c.l.b16 %v125
  %v190 = vunpack.c.l.b16 %v126
  %v191 = vunpack.c.l.b16 %v127
  %v192 = vunpack.c.l.b16 %v128
  %v193 = vunpack.c.l.b16 %v129
  %v194 = vunpack.c.l.b16 %v130
  %v195 = vunpack.c.l.b16 %v131
  %v196 = vunpack.c.l.b16 %v132
  %v197 = vunpack.c.l.b16 %v133
  %v198 = vunpack.c.l.b16 %v134
  %v199 = vunpack.c.l.b16 %v135
  %v200 = vpack.c.b16 %v169, %v168
  %v201 = vpack.c.b16 %v171, %v170
  %v202 = vpack.c.b16 %v173, %v172
  %v203 = vpack.c.b16 %v175, %v174
  %v204 = vpack.c.b16 %v177, %v176
  %v205 = vpack.c.b16 %v179, %v178
  %v206 = vpack.c.b16 %v181, %v180
  %v207 = vpack.c.b16 %v183, %v182
  %v208 = vpack.c.b16 %v185, %v184
  %v209 = vpack.c.b16 %v187, %v186
  %v210 = vpack.c.b16 %v189, %v188
  %v211 = vpack.c.b16 %v191, %v190
  %v212 = vpack.c.b16 %v193, %v192
  %v213 = vpack.c.b16 %v195, %v194
  %v214 = vpack.c.b16 %v197, %v196
  %v215 = vpack.c.b16 %v199, %v198
  %vm216 = vcmask 261120
  %v218 = vsel %vm216, %v103, 0
  %v221 = vsel %vm216, %v200, 0
  %v224 = vsel %vm216, %v201, 0
  %v227 = vsel %vm216, %v202, 0
  %v230 = vsel %vm216, %v203, 0
  %v233 = vsel %vm216, %v204, 0
  %v236 = vsel %vm216, %v205, 0
  %v239 = vsel %vm216, %v206, 0
  %v242 = vsel %vm216, %v207, 0
  %v245 = vsel %vm216, %v208, 0
  %v248 = vsel %vm216, %v209, 0
  %v251 = vsel %vm216, %v210, 0
  %v254 = vsel %vm216, %v211, 0
  %v257 = vsel %vm216, %v212, 0
  %v260 = vsel %vm216, %v213, 0
  %v263 = vsel %vm216, %v214, 0
  %v266 = vsel %vm216, %v215, 0
  %268 = vmatpush.bf16.xpose.msra.mxu0 %v242
  %269 = vmatpush.bf16.xpose.msra.mxu0 %v239
  %270 = vmatpush.bf16.xpose.msra.mxu0 %v236
  %271 = vmatpush.bf16.xpose.msra.mxu0 %v233
  %272 = vmatpush.bf16.xpose.msra.mxu0 %v230
  %273 = vmatpush.bf16.xpose.msra.mxu0 %v227
  %274 = vmatpush.bf16.xpose.msra.mxu0 %v224
  %275 = vmatpush.bf16.xpose.msra.mxu0 %v221
  %276 = vmatmul.bf16.gmra.mxu0 %v218
  %v277 = vpop.f32.mrf.mxu0
  %v278 = vadd.f32 0.0, %v277
  %v279 = vpop.f32.mrf.mxu0
  %280 = vdwg.mxu0
  %281 = vmatpush.bf16.xpose.msra.mxu0 %v266
  %282 = vmatpush.bf16.xpose.msra.mxu0 %v263
  %283 = vmatpush.bf16.xpose.msra.mxu0 %v260
  %284 = vmatpush.bf16.xpose.msra.mxu0 %v257
  %285 = vmatpush.bf16.xpose.msra.mxu0 %v254
  %286 = vmatpush.bf16.xpose.msra.mxu0 %v251
  %287 = vmatpush.bf16.xpose.msra.mxu0 %v248
  %288 = vmatpush.bf16.xpose.msra.mxu0 %v245
  %289 = vmatmul.bf16.gmra.mxu0 %v218
  %v290 = vpop.f32.mrf.mxu0
  %v291 = vadd.f32 0.0, %v290
  %v292 = vpop.f32.mrf.mxu0
  %293 = vdwg.mxu0
  %v294 = vmax.f32 %v278, %v291
  %295 = vmax.xlane.f32.xlu0 %v294
  %v296 = vpop.xlane.xlu0 %295
  %s297 = smul.u32 0, 256
  %s298 = smul.u32 0, 256
  %s299 = sadd.s32 %s297, %s298
  %vm300 = vcmp.eq.f32.partialorder %v278, %v296
  %vm301 = vcmp.eq.f32.partialorder %v291, %v296
  %v302 = vld [vmem:[#allocation3] sm:$0x3]
  %v303 = vperm.slane %v302, 0
  %v304 = vperm.slane %v302, 1
  %v305 = vsel %vm300, %v303, 1073741824
  %v306 = vsel %vm301, %v304, 1073741824
  %vm307 = vcmp.lt.s32.totalorder %v305, %v306
  %v308 = vsel %vm307, %v305, %v306
  %v309 = vand.u32 %v308, 65535
  %v310 = vshra.s32 %v308, 16
  %v311 = vcvt.s32.f32 %v309
  %v312 = vcvt.s32.f32 %v310
  %313 = vmin.xlane.f32.xlu0 %v312
  %v314 = vpop.xlane.xlu0 %313
  %vm315 = vcmp.eq.f32.partialorder %v312, %v314
  %v316 = vsel %vm315, %v311, inf
  %317 = vmin.xlane.f32.xlu0 %v316
  %v318 = vpop.xlane.xlu0 %317
  %v319 = vcvt.f32.s32 %v318
  %v320 = vcvt.f32.s32 %v314
  %v321 = vshll.u32 %v320, 16
  %v322 = vadd.s32 %v321, %v319
  %v323 = vstv %s299
  %v324 = vadd.s32 %v322, %v323
  %v325 = vld [vmem:[#allocation4] sm:$0xff]
  %vm326 = vcmp.gt.f32.partialorder %v296, %v325
  %v327 = vld [vmem:[#allocation5] sm:$0xff]
  %v328 = vsel %vm326, %v324, %v327
  %vm329 = vcmask 7168
  %330 = vst.msk [vmem:[#allocation5] sm:$0xff] %vm329, %v328
  %v331 = vld [vmem:[#allocation4] sm:$0xff]
  %v332 = vsel %vm326, %v296, %v331
  %333 = vst.msk [vmem:[#allocation4] sm:$0xff] %vm329, %v332
  // Predicated region
  $region22: #{tpu_custom_call.1} parent=0 // pred_check
    %p334 = pneg %p41
  $region23: #{tpu_custom_call.1} parent=0 // pred_check_branch
    %336 = sbr.rel (%p334) target = $region25
  $region24: #{tpu_custom_call.1} parent=0 // pred_region
    %v337 = vld [vmem:[#allocation4] sm:$0xff]
    %338 = vst.msk [vmem:[%s4] sm:$0xff] %vm329, %v337
    %v339 = vld [vmem:[#allocation5] sm:$0xff]
    %340 = vst.msk [vmem:[%s5] sm:$0xff] %vm329, %v339
  $region25: #{tpu_custom_call.1} parent=0 // pred_fallthru
    _
  // Predicated region
  $region26: #{tpu_custom_call.1} parent=0 // pred_check
    _
  $region27: #{tpu_custom_call.1} parent=0 // pred_check_branch
    %342 = sbr.rel (0) target = $region29
  $region28: #{tpu_custom_call.1} parent=0 // pred_region
    _
  $region29: #{tpu_custom_call.1} parent=0 // pred_fallthru
    _
  // Predicated region
  $region30: #{tpu_custom_call.1} parent=0 // pred_check
    _
  $region31: #{tpu_custom_call.1} parent=0 // pred_check_branch
    %344 = sbr.rel (0) target = $region33
  $region32: #{tpu_custom_call.1} parent=0 // pred_region
    _
  $region33: #{tpu_custom_call.1} parent=0 // pred_fallthru
    _
  // Predicated region
  $region34: #{tpu_custom_call.1} parent=0 // pred_check
    _
  $region35: #{tpu_custom_call.1} parent=0 // pred_check_branch
    %346 = sbr.rel (0) target = $region37
  $region36: #{tpu_custom_call.1} parent=0 // pred_region
    _
  $region37: #{tpu_custom_call.1} parent=0 // pred_fallthru
    _
  // Predicated region
  $region38: #{tpu_custom_call.1} parent=0 // pred_check
    _
  $region39: #{tpu_custom_call.1} parent=0 // pred_check_branch
    %348 = sbr.rel (0) target = $region41
  $region40: #{tpu_custom_call.1} parent=0 // pred_region
    _
  $region41: #{tpu_custom_call.1} parent=0 // pred_fallthru
    _

</llo_original>
